<compile_context>
chip_gen: v6e
topology: v6e:2x2x1
jax: 0.10.0
libtpu: 0.0.40
codegen_flags: <defaults>
</compile_context>

<pallas_src>
import jax
import jax.numpy as jnp
from jax.experimental import pallas as pl
from jax.experimental.pallas import tpu as pltpu

IMAGE_SIZE = 28 * 28      # 784
HIDDEN_SIZE = 256
LEAKY_SLOPE = 0.2


def _discriminator_kernel(x_ref, w1_ref, b1_ref, w2_ref, b2_ref, w3_ref, b3_ref,
                          o_ref):
    # In-kernel cast to bf16 (MXU-native) right before the layer-1 dot; the
    # HBM stream stays f32/unpadded so there is no extra wrapper pass over x.
    x = x_ref[...].astype(jnp.bfloat16)

    # Layer 1: Linear(784 -> 256) on the MXU (bf16 in, f32 acc) + LeakyReLU(0.2)
    h1 = jnp.dot(x, w1_ref[...], preferred_element_type=jnp.float32)
    h1 = h1 + b1_ref[...]
    h1 = jnp.where(h1 > 0, h1, LEAKY_SLOPE * h1)

    # Layer 2: Linear(256 -> 256) on the MXU (bf16 in, f32 acc) + LeakyReLU(0.2)
    h2 = jnp.dot(h1.astype(jnp.bfloat16), w2_ref[...],
                 preferred_element_type=jnp.float32)
    h2 = h2 + b2_ref[...]
    h2 = jnp.where(h2 > 0, h2, LEAKY_SLOPE * h2)

    # Layer 3: Linear(256 -> 1) as VPU multiply + lane reduce, then Sigmoid.
    h3 = jnp.sum(h2 * w3_ref[...], axis=-1, keepdims=True) + b3_ref[0, 0]
    o_ref[...] = jax.nn.sigmoid(h3)


def _round_up(v, m):
    return ((v + m - 1) // m) * m


def discriminator_forward(x, params, *, batch_tile=1024):
    """x: (B, 784) float32. params: dict of transposed weights / biases."""
    w1, b1, w2, b2, w3, b3 = (params["w1"], params["b1"], params["w2"],
                              params["b2"], params["w3"], params["b3"])
    B = x.shape[0]

    # Batch tile: large (multiple of 256) for big batches; for small batches
    # just round the batch up to the 8-sublane boundary.
    if B >= batch_tile:
        tm = batch_tile
    else:
        tm = _round_up(B, 8)
    num_tiles = pl.cdiv(B, tm)
    b_pad = num_tiles * tm

    # Only the batch dimension is ever padded (and only when B % tm != 0);
    # no dtype cast and no K padding of x in the wrapper.
    x_in = x if b_pad == B else jnp.pad(x, ((0, b_pad - B), (0, 0)))

    # Small resident operands: cast the matmul weights to bf16, keep biases f32.
    w1_b = w1.astype(jnp.bfloat16)                              # (784, 256)
    w2_b = w2.astype(jnp.bfloat16)                              # (256, 256)
    b1_r = b1.reshape(1, HIDDEN_SIZE).astype(jnp.float32)
    b2_r = b2.reshape(1, HIDDEN_SIZE).astype(jnp.float32)
    w3_row = w3.reshape(1, HIDDEN_SIZE).astype(jnp.float32)     # (256,1) -> (1,256)
    b3_s = b3.reshape(1, 1).astype(jnp.float32)                 # SMEM scalar

    # VMEM budget: 2 double-buffered x tiles + resident weights (x2 bufs) +
    # f32/bf16 intermediates + headroom; clamp to the v7x scoped window.
    x_tile_bytes = tm * IMAGE_SIZE * 4
    weight_bytes = (IMAGE_SIZE * HIDDEN_SIZE + 2 * HIDDEN_SIZE * HIDDEN_SIZE) * 2
    inter_bytes = 3 * tm * HIDDEN_SIZE * 4 + tm * IMAGE_SIZE * 2
    vmem_bytes = 2 * x_tile_bytes + 2 * weight_bytes + inter_bytes + (2 << 20)
    vmem_bytes = int(min(max(vmem_bytes, 8 << 20), 28 << 20))

    flops = 2 * b_pad * (IMAGE_SIZE * HIDDEN_SIZE
                         + HIDDEN_SIZE * HIDDEN_SIZE + HIDDEN_SIZE)
    bytes_accessed = (b_pad * IMAGE_SIZE * 4                    # x (f32, unpadded K)
                      + w1_b.size * 2 + w2_b.size * 2           # bf16 weights
                      + (b1_r.size + b2_r.size + w3_row.size + b3_s.size) * 4
                      + b_pad * 4)                              # output

    out = pl.pallas_call(
        _discriminator_kernel,
        out_shape=jax.ShapeDtypeStruct((b_pad, 1), jnp.float32),
        grid=(num_tiles,),
        in_specs=[
            pl.BlockSpec((tm, IMAGE_SIZE), lambda i: (i, 0)),              # x streams
            pl.BlockSpec((IMAGE_SIZE, HIDDEN_SIZE), lambda i: (0, 0)),     # w1 resident
            pl.BlockSpec((1, HIDDEN_SIZE), lambda i: (0, 0)),              # b1 resident
            pl.BlockSpec((HIDDEN_SIZE, HIDDEN_SIZE), lambda i: (0, 0)),    # w2 resident
            pl.BlockSpec((1, HIDDEN_SIZE), lambda i: (0, 0)),              # b2 resident
            pl.BlockSpec((1, HIDDEN_SIZE), lambda i: (0, 0)),              # w3 row resident
            pl.BlockSpec(memory_space=pltpu.MemorySpace.SMEM),             # b3 scalar
        ],
        out_specs=pl.BlockSpec((tm, 1), lambda i: (i, 0)),
        compiler_params=pltpu.CompilerParams(
            dimension_semantics=("parallel",),
            vmem_limit_bytes=vmem_bytes,
        ),
        cost_estimate=pl.CostEstimate(
            flops=flops, transcendentals=b_pad, bytes_accessed=bytes_accessed),
    )(x_in, w1_b, b1_r, w2_b, b2_r, w3_row, b3_s)

    return out[:B]


def init_params(key):
    """PyTorch nn.Linear default init: U(-1/sqrt(fan_in), 1/sqrt(fan_in)).
    Weights stored transposed (in_features, out_features)."""
    keys = jax.random.split(key, 6)

    def linear(kw, kb, fan_in, fan_out):
        bound = 1.0 / jnp.sqrt(jnp.float32(fan_in))
        w = jax.random.uniform(kw, (fan_in, fan_out), jnp.float32, -bound, bound)
        b = jax.random.uniform(kb, (1, fan_out), jnp.float32, -bound, bound)
        return w, b

    w1, b1 = linear(keys[0], keys[1], IMAGE_SIZE, HIDDEN_SIZE)
    w2, b2 = linear(keys[2], keys[3], HIDDEN_SIZE, HIDDEN_SIZE)
    w3, b3 = linear(keys[4], keys[5], HIDDEN_SIZE, 1)
    return dict(w1=w1, b1=b1, w2=w2, b2=b2, w3=w3, b3=b3)


def _reference_forward(x, p):
    """Pure-JAX f32 reference (mirrors the PyTorch module)."""
    h = x @ p["w1"] + p["b1"]
    h = jnp.where(h > 0, h, 0.2 * h)
    h = h @ p["w2"] + p["b2"]
    h = jnp.where(h > 0, h, 0.2 * h)
    h = h @ p["w3"] + p["b3"]
    return jax.nn.sigmoid(h)


if __name__ == "__main__":
    key = jax.random.PRNGKey(0)
    k_param, k_img = jax.random.split(key)

    params = init_params(k_param)

    batch = 8
    # Fake flattened MNIST images scaled to [-1, 1] (typical GAN preprocessing).
    img = jax.random.uniform(k_img, (batch, IMAGE_SIZE), jnp.float32, -1.0, 1.0)

    out = discriminator_forward(img, params)
    out = jax.block_until_ready(out)

    ref = _reference_forward(img, params)
    assert out.shape == (batch, 1), out.shape
    # bf16 matmul operands -> small absolute tolerance vs. the f32 reference.
    assert jnp.allclose(out, ref, atol=2e-2, rtol=0.0), "mismatch vs reference"

    print("KERNEL_OK")
</pallas_src>

<mosaic_0001>
module attributes {stable_mosaic.version = 11 : i64} {
  func.func @_discriminator_kernel(%arg0: i32, %arg1: memref<8x784xf32, #tpu.memory_space<vmem>>, %arg2: memref<784x256xbf16, #tpu.memory_space<vmem>>, %arg3: memref<1x256xf32, #tpu.memory_space<vmem>>, %arg4: memref<256x256xbf16, #tpu.memory_space<vmem>>, %arg5: memref<1x256xf32, #tpu.memory_space<vmem>>, %arg6: memref<1x256xf32, #tpu.memory_space<vmem>>, %arg7: memref<1x1xf32, #tpu.memory_space<smem>>, %arg8: memref<8x1xf32, #tpu.memory_space<vmem>>) attributes {dimension_semantics = [#tpu.dimension_semantics<parallel>], iteration_bounds = array<i64: 1>, scalar_prefetch = 0 : i64, scratch_operands = 0 : i64, tpu.core_type = #tpu.core_type<tc>, window_params = [{transform_indices = @transform_0, window_bounds = array<i64: 8, 784>}, {pipeline_mode = #tpu.pipeline_mode<synchronous>, transform_indices = @transform_1, window_bounds = array<i64: 784, 256>}, {pipeline_mode = #tpu.pipeline_mode<synchronous>, transform_indices = @transform_2, window_bounds = array<i64: 1, 256>}, {pipeline_mode = #tpu.pipeline_mode<synchronous>, transform_indices = @transform_3, window_bounds = array<i64: 256, 256>}, {pipeline_mode = #tpu.pipeline_mode<synchronous>, transform_indices = @transform_4, window_bounds = array<i64: 1, 256>}, {pipeline_mode = #tpu.pipeline_mode<synchronous>, transform_indices = @transform_5, window_bounds = array<i64: 1, 256>}, {transform_indices = @transform_6, window_bounds = array<i64: 1, 1>}, {transform_indices = @transform_7, window_bounds = array<i64: 8, 1>}]} {
    %c0 = arith.constant 0 : index
    %c0_0 = arith.constant 0 : index
    %0 = vector.load %arg1[%c0, %c0_0] : memref<8x784xf32, #tpu.memory_space<vmem>>, vector<8x784xf32>
    %1 = arith.truncf %0 : vector<8x784xf32> to vector<8x784xbf16>
    %c0_1 = arith.constant 0 : index
    %c0_2 = arith.constant 0 : index
    %2 = vector.load %arg2[%c0_1, %c0_2] : memref<784x256xbf16, #tpu.memory_space<vmem>>, vector<784x256xbf16>
    %cst = arith.constant dense<0.000000e+00> : vector<8x256xf32>
    %3 = tpu.matmul %1, %2, %cst {dimension_numbers = #tpu.dot_dimension_numbers<[1], [0], [0], [1], [0, 0, 1, 1], [], []>} : vector<8x784xbf16>, vector<784x256xbf16>, vector<8x256xf32> -> vector<8x256xf32>
    %c0_3 = arith.constant 0 : index
    %c0_4 = arith.constant 0 : index
    %4 = vector.load %arg3[%c0_3, %c0_4] : memref<1x256xf32, #tpu.memory_space<vmem>>, vector<1x256xf32>
    %5 = vector.broadcast %4 : vector<1x256xf32> to vector<8x256xf32>
    %6 = arith.addf %3, %5 : vector<8x256xf32>
    %cst_5 = arith.constant 0.000000e+00 : f32
    %7 = vector.broadcast %cst_5 : f32 to vector<8x256xf32>
    %8 = arith.cmpf ogt, %6, %7 : vector<8x256xf32>
    %cst_6 = arith.constant 2.000000e-01 : f32
    %9 = vector.broadcast %cst_6 : f32 to vector<8x256xf32>
    %10 = arith.mulf %9, %6 : vector<8x256xf32>
    %11 = arith.select %8, %6, %10 : vector<8x256xi1>, vector<8x256xf32>
    %12 = arith.truncf %11 : vector<8x256xf32> to vector<8x256xbf16>
    %c0_7 = arith.constant 0 : index
    %c0_8 = arith.constant 0 : index
    %13 = vector.load %arg4[%c0_7, %c0_8] : memref<256x256xbf16, #tpu.memory_space<vmem>>, vector<256x256xbf16>
    %cst_9 = arith.constant dense<0.000000e+00> : vector<8x256xf32>
    %14 = tpu.matmul %12, %13, %cst_9 {dimension_numbers = #tpu.dot_dimension_numbers<[1], [0], [0], [1], [0, 0, 1, 1], [], []>} : vector<8x256xbf16>, vector<256x256xbf16>, vector<8x256xf32> -> vector<8x256xf32>
    %c0_10 = arith.constant 0 : index
    %c0_11 = arith.constant 0 : index
    %15 = vector.load %arg5[%c0_10, %c0_11] : memref<1x256xf32, #tpu.memory_space<vmem>>, vector<1x256xf32>
    %16 = vector.broadcast %15 : vector<1x256xf32> to vector<8x256xf32>
    %17 = arith.addf %14, %16 : vector<8x256xf32>
    %cst_12 = arith.constant 0.000000e+00 : f32
    %18 = vector.broadcast %cst_12 : f32 to vector<8x256xf32>
    %19 = arith.cmpf ogt, %17, %18 : vector<8x256xf32>
    %cst_13 = arith.constant 2.000000e-01 : f32
    %20 = vector.broadcast %cst_13 : f32 to vector<8x256xf32>
    %21 = arith.mulf %20, %17 : vector<8x256xf32>
    %22 = arith.select %19, %17, %21 : vector<8x256xi1>, vector<8x256xf32>
    %c0_14 = arith.constant 0 : index
    %c0_15 = arith.constant 0 : index
    %23 = vector.load %arg6[%c0_14, %c0_15] : memref<1x256xf32, #tpu.memory_space<vmem>>, vector<1x256xf32>
    %24 = vector.broadcast %23 : vector<1x256xf32> to vector<8x256xf32>
    %25 = arith.mulf %22, %24 : vector<8x256xf32>
    %cst_16 = arith.constant dense<0.000000e+00> : vector<8xf32>
    %26 = vector.multi_reduction <add>, %25, %cst_16 [1] : vector<8x256xf32> to vector<8xf32>
    %27 = vector.shape_cast %26 : vector<8xf32> to vector<8x1xf32>
    %c0_17 = arith.constant 0 : index
    %c0_18 = arith.constant 0 : index
    %28 = memref.load %arg7[%c0_17, %c0_18] : memref<1x1xf32, #tpu.memory_space<smem>>
    %29 = vector.broadcast %28 : f32 to vector<8x1xf32>
    %30 = arith.addf %27, %29 : vector<8x1xf32>
    %31 = arith.negf %30 : vector<8x1xf32>
    %32 = math.exp %31 : vector<8x1xf32>
    %cst_19 = arith.constant 1.000000e+00 : f32
    %33 = vector.broadcast %cst_19 : f32 to vector<8x1xf32>
    %34 = arith.addf %33, %32 : vector<8x1xf32>
    %35 = arith.divf %33, %34 : vector<8x1xf32>
    %c0_20 = arith.constant 0 : index
    %c0_21 = arith.constant 0 : index
    %36 = vector.load %arg8[%c0_20, %c0_21] : memref<8x1xf32, #tpu.memory_space<vmem>>, vector<8x1xf32>
    tpu.vector_store %arg8[%c0_20, %c0_21], %35 {strides = array<i32>} : memref<8x1xf32, #tpu.memory_space<vmem>>, vector<8x1xf32>,
    return
  }
  func.func @transform_0(%arg0: i32) -> (i32, i32) {
    %c0_i32 = arith.constant 0 : i32
    %c0_i32_0 = arith.constant 0 : i32
    return %arg0, %c0_i32 : i32, i32
  }
  func.func @transform_1(%arg0: i32) -> (i32, i32) {
    %c0_i32 = arith.constant 0 : i32
    %c0_i32_0 = arith.constant 0 : i32
    %c0_i32_1 = arith.constant 0 : i32
    return %c0_i32, %c0_i32_0 : i32, i32
  }
  func.func @transform_2(%arg0: i32) -> (i32, i32) {
    %c0_i32 = arith.constant 0 : i32
    %c0_i32_0 = arith.constant 0 : i32
    %c0_i32_1 = arith.constant 0 : i32
    return %c0_i32, %c0_i32_0 : i32, i32
  }
  func.func @transform_3(%arg0: i32) -> (i32, i32) {
    %c0_i32 = arith.constant 0 : i32
    %c0_i32_0 = arith.constant 0 : i32
    %c0_i32_1 = arith.constant 0 : i32
    return %c0_i32, %c0_i32_0 : i32, i32
  }
  func.func @transform_4(%arg0: i32) -> (i32, i32) {
    %c0_i32 = arith.constant 0 : i32
    %c0_i32_0 = arith.constant 0 : i32
    %c0_i32_1 = arith.constant 0 : i32
    return %c0_i32, %c0_i32_0 : i32, i32
  }
  func.func @transform_5(%arg0: i32) -> (i32, i32) {
    %c0_i32 = arith.constant 0 : i32
    %c0_i32_0 = arith.constant 0 : i32
    %c0_i32_1 = arith.constant 0 : i32
    return %c0_i32, %c0_i32_0 : i32, i32
  }
  func.func @transform_6(%arg0: i32) -> (i32, i32) {
    %c0_i32 = arith.constant 0 : i32
    %c0_i32_0 = arith.constant 0 : i32
    %c0_i32_1 = arith.constant 0 : i32
    return %c0_i32, %c0_i32_0 : i32, i32
  }
  func.func @transform_7(%arg0: i32) -> (i32, i32) {
    %c0_i32 = arith.constant 0 : i32
    %c0_i32_0 = arith.constant 0 : i32
    return %arg0, %c0_i32 : i32, i32
  }
}

</mosaic_0001>

<llo_original>
// kernel: tpu_custom_call.1
$region0: #{tpu_custom_call.1}
  #allocation0 [shape = 'u32[]', space=smem, size = 0x4, offset = 0x4, fixed_abs, tag = 'smem constant byte address 0x4 - core index']
  #allocation1 [shape = 'u32[144,128]{1,0:T(1,128)}', space=vmem, size = 0x12000, scoped, tag = 'internal scratch']
  #allocation2 [shape = 'f32[1,1]{1,0:T(1,128)S(6)}', space=smem, size = 0x200, scoped, tag = 'scoped memory for tpu_custom_call.1']
  %s0 = inlined_call_operand.hbm [shape: f32[8,784], index: 0, kind: input, shape index: {}]
  %s1 = inlined_call_operand.hbm [shape: bf16[784,256], index: 1, kind: input, shape index: {}]
  %s2 = inlined_call_operand.vmem [shape: f32[1,256], index: 2, kind: input, shape index: {}]
  %s3 = inlined_call_operand.hbm [shape: bf16[256,256], index: 3, kind: input, shape index: {}]
  %s4 = inlined_call_operand.vmem [shape: f32[1,256], index: 4, kind: input, shape index: {}]
  %s5 = inlined_call_operand.vmem [shape: f32[1,256], index: 5, kind: input, shape index: {}]
  %s6 = inlined_call_operand.<no memory space> [shape: f32[1,1], index: 6, kind: input, shape index: {}]
  %s7 = inlined_call_operand.vmem [shape: f32[8,1], index: 7, kind: output, shape index: {}]
  %s8 = sld [smem:[#allocation0]]
  $region50: #{tpu_custom_call.1} parent=0
    _
  %s10 = ssub.s32 1, %s8
  %s11 = scalar_select 0, %s10, %s8
  %12 = sst [smem:[#allocation2]] %s6
  $region1: #{tpu_custom_call.1} parent=0
    #allocation3 [shape = 'u8[28672]{0}', space=vmem, size = 0x7000, scoped, tag = 'input window, operand 0, single buffered']
    #allocation4 [shape = 's32[1]{0}', space=sflag, size = 0x4, scoped, tag = 'scoped memory for tpu_custom_call.1']
    #allocation5 [shape = 'u8[401408]{0}', space=vmem, size = 0x62000, scoped, tag = 'input window, operand 1, single buffered']
    #allocation6 [shape = 's32[1]{0}', space=sflag, size = 0x4, scoped, tag = 'scoped memory for tpu_custom_call.1']
    #allocation7 [shape = 'u8[131072]{0}', space=vmem, size = 0x20000, scoped, tag = 'input window, operand 3, single buffered']
    %13 = vsyncpa [#allocation4], 0
    %14 = vsyncpa [#allocation6], 0
    // Predicated region
    $region2: #{tpu_custom_call.1} parent=1 // pred_check
      _
    $region3: #{tpu_custom_call.1} parent=1 // pred_check_branch
      %16 = sbr.rel (0) target = $region5
    $region4: #{tpu_custom_call.1} parent=1 // pred_region
      %s18 = ssub.s32 896, 896
      %19 = vsyncadd [#allocation4], %s18
      %s21 = sshll.u32 [#allocation3], 4
      %s22 = int_to_ptr.vmem [resolvable:$true] %s21
      %24 = dma.hbm_to_vmem [thread:$0]  %s0, 896, %s22, [#allocation4]
    $region5: #{tpu_custom_call.1} parent=1 // pred_fallthru
      _
    // Predicated region
    $region6: #{tpu_custom_call.1} parent=1 // pred_check
      _
    $region7: #{tpu_custom_call.1} parent=1 // pred_check_branch
      %26 = sbr.rel (0) target = $region9
    $region8: #{tpu_custom_call.1} parent=1 // pred_region
      %s28 = ssub.s32 12544, 12544
      %29 = vsyncadd [#allocation6], %s28
      %s30 = sshll.u32 [#allocation5], 4
      %s31 = int_to_ptr.vmem [resolvable:$true] %s30
      %36 = dma.hbm_to_vmem [thread:$0]  %s1, 12544, %s31, [#allocation6], 128, 128, 8
    $region9: #{tpu_custom_call.1} parent=1 // pred_fallthru
      _
    // Predicated region
    $region10: #{tpu_custom_call.1} parent=1 // pred_check
      _
    $region11: #{tpu_custom_call.1} parent=1 // pred_check_branch
      %38 = sbr.rel (0) target = $region13
    $region12: #{tpu_custom_call.1} parent=1 // pred_region
      _
    $region13: #{tpu_custom_call.1} parent=1 // pred_fallthru
      _
    // Predicated region
    $region14: #{tpu_custom_call.1} parent=1 // pred_check
      _
    $region15: #{tpu_custom_call.1} parent=1 // pred_check_branch
      %40 = sbr.rel (0) target = $region17
    $region16: #{tpu_custom_call.1} parent=1 // pred_region
      %s42 = ssub.s32 4096, 4096
      %43 = vsyncadd [#allocation6], %s42
      %s44 = sshll.u32 [#allocation7], 4
      %s45 = int_to_ptr.vmem [resolvable:$true] %s44
      %50 = dma.hbm_to_vmem [thread:$0]  %s3, 4096, %s45, [#allocation6], 128, 128, 8
    $region17: #{tpu_custom_call.1} parent=1 // pred_fallthru
      _
    // Predicated region
    $region18: #{tpu_custom_call.1} parent=1 // pred_check
      _
    $region19: #{tpu_custom_call.1} parent=1 // pred_check_branch
      %52 = sbr.rel (0) target = $region21
    $region20: #{tpu_custom_call.1} parent=1 // pred_region
      _
    $region21: #{tpu_custom_call.1} parent=1 // pred_fallthru
      _
    // Predicated region
    $region22: #{tpu_custom_call.1} parent=1 // pred_check
      _
    $region23: #{tpu_custom_call.1} parent=1 // pred_check_branch
      %54 = sbr.rel (0) target = $region25
    $region24: #{tpu_custom_call.1} parent=1 // pred_region
      _
    $region25: #{tpu_custom_call.1} parent=1 // pred_fallthru
      _
    // Predicated region
    $region26: #{tpu_custom_call.1} parent=1 // pred_check
      _
    $region27: #{tpu_custom_call.1} parent=1 // pred_check_branch
      %56 = sbr.rel (0) target = $region29
    $region28: #{tpu_custom_call.1} parent=1 // pred_region
      _
    $region29: #{tpu_custom_call.1} parent=1 // pred_fallthru
      _
    // Predicated region
    $region30: #{tpu_custom_call.1} parent=1 // pred_check
      _
    $region31: #{tpu_custom_call.1} parent=1 // pred_check_branch
      %58 = sbr.rel (0) target = $region33
    $region32: #{tpu_custom_call.1} parent=1 // pred_region
      %59 = dma.done [#allocation4], 896
    $region33: #{tpu_custom_call.1} parent=1 // pred_fallthru
      _
    // Predicated region
    $region34: #{tpu_custom_call.1} parent=1 // pred_check
      _
    $region35: #{tpu_custom_call.1} parent=1 // pred_check_branch
      %61 = sbr.rel (0) target = $region37
    $region36: #{tpu_custom_call.1} parent=1 // pred_region
      %62 = dma.done [#allocation6], 12544
    $region37: #{tpu_custom_call.1} parent=1 // pred_fallthru
      _
    // Predicated region
    $region38: #{tpu_custom_call.1} parent=1 // pred_check
      _
    $region39: #{tpu_custom_call.1} parent=1 // pred_check_branch
      %64 = sbr.rel (0) target = $region41
    $region40: #{tpu_custom_call.1} parent=1 // pred_region
      %65 = dma.done [#allocation6], 4096
    $region41: #{tpu_custom_call.1} parent=1 // pred_fallthru
      _
    %v67 = vld [vmem:[#allocation3] sm:$0xff]
    %v68 = vld [vmem:[#allocation3 + $0x8] sm:$0xff]
    %v69 = vld [vmem:[#allocation3 + $0x10] sm:$0xff]
    %v70 = vld [vmem:[#allocation3 + $0x18] sm:$0xff]
    %v71 = vld [vmem:[#allocation3 + $0x20] sm:$0xff]
    %v72 = vld [vmem:[#allocation3 + $0x28] sm:$0xff]
    %v73 = vld [vmem:[#allocation3 + $0x30] sm:$0xff]
    %v74 = vpack.c.bf16 %v67, %v67
    %v75 = vpack.c.bf16 %v68, %v68
    %v76 = vpack.c.bf16 %v69, %v69
    %v77 = vpack.c.bf16 %v70, %v70
    %v78 = vpack.c.bf16 %v71, %v71
    %v79 = vpack.c.bf16 %v72, %v72
    %v80 = vpack.c.bf16 %v73, %v73
    %v81 = vld [vmem:[#allocation5] sm:$0xff]
    %v82 = vld [vmem:[#allocation5 + $0x8] sm:$0xff]
    %v83 = vld [vmem:[#allocation5 + $0x10] sm:$0xff]
    %v84 = vld [vmem:[#allocation5 + $0x18] sm:$0xff]
    %v85 = vld [vmem:[#allocation5 + $0x20] sm:$0xff]
    %v86 = vld [vmem:[#allocation5 + $0x28] sm:$0xff]
    %v87 = vld [vmem:[#allocation5 + $0x30] sm:$0xff]
    %v88 = vld [vmem:[#allocation5 + $0x38] sm:$0xff]
    %v89 = vld [vmem:[#allocation5 + $0x40] sm:$0xff]
    %v90 = vld [vmem:[#allocation5 + $0x48] sm:$0xff]
    %v91 = vld [vmem:[#allocation5 + $0x50] sm:$0xff]
    %v92 = vld [vmem:[#allocation5 + $0x58] sm:$0xff]
    %v93 = vld [vmem:[#allocation5 + $0x60] sm:$0xff]
    %v94 = vld [vmem:[#allocation5 + $0x68] sm:$0xff]
    %v95 = vld [vmem:[#allocation5 + $0x70] sm:$0xff]
    %v96 = vld [vmem:[#allocation5 + $0x78] sm:$0xff]
    %v97 = vld [vmem:[#allocation5 + $0x80] sm:$0xff]
    %v98 = vld [vmem:[#allocation5 + $0x88] sm:$0xff]
    %v99 = vld [vmem:[#allocation5 + $0x90] sm:$0xff]
    %v100 = vld [vmem:[#allocation5 + $0x98] sm:$0xff]
    %v101 = vld [vmem:[#allocation5 + $0xa0] sm:$0xff]
    %v102 = vld [vmem:[#allocation5 + $0xa8] sm:$0xff]
    %v103 = vld [vmem:[#allocation5 + $0xb0] sm:$0xff]
    %v104 = vld [vmem:[#allocation5 + $0xb8] sm:$0xff]
    %v105 = vld [vmem:[#allocation5 + $0xc0] sm:$0xff]
    %v106 = vld [vmem:[#allocation5 + $0xc8] sm:$0xff]
    %v107 = vld [vmem:[#allocation5 + $0xd0] sm:$0xff]
    %v108 = vld [vmem:[#allocation5 + $0xd8] sm:$0xff]
    %v109 = vld [vmem:[#allocation5 + $0xe0] sm:$0xff]
    %v110 = vld [vmem:[#allocation5 + $0xe8] sm:$0xff]
    %v111 = vld [vmem:[#allocation5 + $0xf0] sm:$0xff]
    %v112 = vld [vmem:[#allocation5 + $0xf8] sm:$0xff]
    %v113 = vld [vmem:[#allocation5 + $0x100] sm:$0xff]
    %v114 = vld [vmem:[#allocation5 + $0x108] sm:$0xff]
    %v115 = vld [vmem:[#allocation5 + $0x110] sm:$0xff]
    %v116 = vld [vmem:[#allocation5 + $0x118] sm:$0xff]
    %v117 = vld [vmem:[#allocation5 + $0x120] sm:$0xff]
    %v118 = vld [vmem:[#allocation5 + $0x128] sm:$0xff]
    %v119 = vld [vmem:[#allocation5 + $0x130] sm:$0xff]
    %v120 = vld [vmem:[#allocation5 + $0x138] sm:$0xff]
    %v121 = vld [vmem:[#allocation5 + $0x140] sm:$0xff]
    %v122 = vld [vmem:[#allocation5 + $0x148] sm:$0xff]
    %v123 = vld [vmem:[#allocation5 + $0x150] sm:$0xff]
    %v124 = vld [vmem:[#allocation5 + $0x158] sm:$0xff]
    %v125 = vld [vmem:[#allocation5 + $0x160] sm:$0xff]
    %v126 = vld [vmem:[#allocation5 + $0x168] sm:$0xff]
    %v127 = vld [vmem:[#allocation5 + $0x170] sm:$0xff]
    %v128 = vld [vmem:[#allocation5 + $0x178] sm:$0xff]
    %v129 = vld [vmem:[#allocation5 + $0x180] sm:$0xff]
    %v130 = vld [vmem:[#allocation5 + $0x188] sm:$0xff]
    %v131 = vld [vmem:[#allocation5 + $0x190] sm:$0xff]
    %v132 = vld [vmem:[#allocation5 + $0x198] sm:$0xff]
    %v133 = vld [vmem:[#allocation5 + $0x1a0] sm:$0xff]
    %v134 = vld [vmem:[#allocation5 + $0x1a8] sm:$0xff]
    %v135 = vld [vmem:[#allocation5 + $0x1b0] sm:$0xff]
    %v136 = vld [vmem:[#allocation5 + $0x1b8] sm:$0xff]
    %v137 = vld [vmem:[#allocation5 + $0x1c0] sm:$0xff]
    %v138 = vld [vmem:[#allocation5 + $0x1c8] sm:$0xff]
    %v139 = vld [vmem:[#allocation5 + $0x1d0] sm:$0xff]
    %v140 = vld [vmem:[#allocation5 + $0x1d8] sm:$0xff]
    %v141 = vld [vmem:[#allocation5 + $0x1e0] sm:$0xff]
    %v142 = vld [vmem:[#allocation5 + $0x1e8] sm:$0xff]
    %v143 = vld [vmem:[#allocation5 + $0x1f0] sm:$0xff]
    %v144 = vld [vmem:[#allocation5 + $0x1f8] sm:$0xff]
    %v145 = vld [vmem:[#allocation5 + $0x200] sm:$0xff]
    %v146 = vld [vmem:[#allocation5 + $0x208] sm:$0xff]
    %v147 = vld [vmem:[#allocation5 + $0x210] sm:$0xff]
    %v148 = vld [vmem:[#allocation5 + $0x218] sm:$0xff]
    %v149 = vld [vmem:[#allocation5 + $0x220] sm:$0xff]
    %v150 = vld [vmem:[#allocation5 + $0x228] sm:$0xff]
    %v151 = vld [vmem:[#allocation5 + $0x230] sm:$0xff]
    %v152 = vld [vmem:[#allocation5 + $0x238] sm:$0xff]
    %v153 = vld [vmem:[#allocation5 + $0x240] sm:$0xff]
    %v154 = vld [vmem:[#allocation5 + $0x248] sm:$0xff]
    %v155 = vld [vmem:[#allocation5 + $0x250] sm:$0xff]
    %v156 = vld [vmem:[#allocation5 + $0x258] sm:$0xff]
    %v157 = vld [vmem:[#allocation5 + $0x260] sm:$0xff]
    %v158 = vld [vmem:[#allocation5 + $0x268] sm:$0xff]
    %v159 = vld [vmem:[#allocation5 + $0x270] sm:$0xff]
    %v160 = vld [vmem:[#allocation5 + $0x278] sm:$0xff]
    %v161 = vld [vmem:[#allocation5 + $0x280] sm:$0xff]
    %v162 = vld [vmem:[#allocation5 + $0x288] sm:$0xff]
    %v163 = vld [vmem:[#allocation5 + $0x290] sm:$0xff]
    %v164 = vld [vmem:[#allocation5 + $0x298] sm:$0xff]
    %v165 = vld [vmem:[#allocation5 + $0x2a0] sm:$0xff]
    %v166 = vld [vmem:[#allocation5 + $0x2a8] sm:$0xff]
    %v167 = vld [vmem:[#allocation5 + $0x2b0] sm:$0xff]
    %v168 = vld [vmem:[#allocation5 + $0x2b8] sm:$0xff]
    %v169 = vld [vmem:[#allocation5 + $0x2c0] sm:$0xff]
    %v170 = vld [vmem:[#allocation5 + $0x2c8] sm:$0xff]
    %v171 = vld [vmem:[#allocation5 + $0x2d0] sm:$0xff]
    %v172 = vld [vmem:[#allocation5 + $0x2d8] sm:$0xff]
    %v173 = vld [vmem:[#allocation5 + $0x2e0] sm:$0xff]
    %v174 = vld [vmem:[#allocation5 + $0x2e8] sm:$0xff]
    %v175 = vld [vmem:[#allocation5 + $0x2f0] sm:$0xff]
    %v176 = vld [vmem:[#allocation5 + $0x2f8] sm:$0xff]
    %v177 = vld [vmem:[#allocation5 + $0x300] sm:$0xff]
    %v178 = vld [vmem:[#allocation5 + $0x308] sm:$0xff]
    %v179 = vld [vmem:[%s2] sm:$0x3]
    %v181 = vlaneseq
    %v182 = vshrl.u32 %v181, 7
    %v183 = vsub.s32 0, %v182
    %v184 = vrot.slane %v179, %v183
    %v185 = vlaneseq
    %v186 = vshrl.u32 %v185, 7
    %v187 = vsub.s32 1, %v186
    %v188 = vrot.slane %v179, %v187
    %v289 = vunpack.c.l.b16 %v81
    %v290 = vunpack.c.h.b16 %v81
    %v291 = vunpack.c.l.b16 %v82
    %v292 = vunpack.c.h.b16 %v82
    %v293 = vunpack.c.l.b16 %v83
    %v294 = vunpack.c.h.b16 %v83
    %v295 = vunpack.c.l.b16 %v84
    %v296 = vunpack.c.h.b16 %v84
    %v297 = vunpack.c.l.b16 %v85
    %v298 = vunpack.c.h.b16 %v85
    %v299 = vunpack.c.l.b16 %v86
    %v300 = vunpack.c.h.b16 %v86
    %v301 = vunpack.c.l.b16 %v87
    %v302 = vunpack.c.h.b16 %v87
    %v303 = vunpack.c.l.b16 %v88
    %v304 = vunpack.c.h.b16 %v88
    %v305 = vunpack.c.l.b16 %v89
    %v306 = vunpack.c.h.b16 %v89
    %v307 = vunpack.c.l.b16 %v90
    %v308 = vunpack.c.h.b16 %v90
    %v309 = vunpack.c.l.b16 %v91
    %v310 = vunpack.c.h.b16 %v91
    %v311 = vunpack.c.l.b16 %v92
    %v312 = vunpack.c.h.b16 %v92
    %v313 = vunpack.c.l.b16 %v93
    %v314 = vunpack.c.h.b16 %v93
    %v315 = vunpack.c.l.b16 %v94
    %v316 = vunpack.c.h.b16 %v94
    %v317 = vunpack.c.l.b16 %v95
    %v318 = vunpack.c.h.b16 %v95
    %v319 = vunpack.c.l.b16 %v96
    %v320 = vunpack.c.h.b16 %v96
    %v321 = vunpack.c.l.b16 %v97
    %v322 = vunpack.c.h.b16 %v97
    %v323 = vunpack.c.l.b16 %v98
    %v324 = vunpack.c.h.b16 %v98
    %v325 = vunpack.c.l.b16 %v99
    %v326 = vunpack.c.h.b16 %v99
    %v327 = vunpack.c.l.b16 %v100
    %v328 = vunpack.c.h.b16 %v100
    %v329 = vunpack.c.l.b16 %v101
    %v330 = vunpack.c.h.b16 %v101
    %v331 = vunpack.c.l.b16 %v102
    %v332 = vunpack.c.h.b16 %v102
    %v333 = vunpack.c.l.b16 %v103
    %v334 = vunpack.c.h.b16 %v103
    %v335 = vunpack.c.l.b16 %v104
    %v336 = vunpack.c.h.b16 %v104
    %v337 = vunpack.c.l.b16 %v105
    %v338 = vunpack.c.h.b16 %v105
    %v339 = vunpack.c.l.b16 %v106
    %v340 = vunpack.c.h.b16 %v106
    %v341 = vunpack.c.l.b16 %v107
    %v342 = vunpack.c.h.b16 %v107
    %v343 = vunpack.c.l.b16 %v108
    %v344 = vunpack.c.h.b16 %v108
    %v345 = vunpack.c.l.b16 %v109
    %v346 = vunpack.c.h.b16 %v109
    %v347 = vunpack.c.l.b16 %v110
    %v348 = vunpack.c.h.b16 %v110
    %v349 = vunpack.c.l.b16 %v111
    %v350 = vunpack.c.h.b16 %v111
    %v351 = vunpack.c.l.b16 %v112
    %v352 = vunpack.c.h.b16 %v112
    %v353 = vunpack.c.l.b16 %v113
    %v354 = vunpack.c.h.b16 %v113
    %v355 = vunpack.c.l.b16 %v114
    %v356 = vunpack.c.h.b16 %v114
    %v357 = vunpack.c.l.b16 %v115
    %v358 = vunpack.c.h.b16 %v115
    %v359 = vunpack.c.l.b16 %v116
    %v360 = vunpack.c.h.b16 %v116
    %v361 = vunpack.c.l.b16 %v117
    %v362 = vunpack.c.h.b16 %v117
    %v363 = vunpack.c.l.b16 %v118
    %v364 = vunpack.c.h.b16 %v118
    %v365 = vunpack.c.l.b16 %v119
    %v366 = vunpack.c.h.b16 %v119
    %v367 = vunpack.c.l.b16 %v120
    %v368 = vunpack.c.h.b16 %v120
    %v369 = vunpack.c.l.b16 %v121
    %v370 = vunpack.c.h.b16 %v121
    %v371 = vunpack.c.l.b16 %v122
    %v372 = vunpack.c.h.b16 %v122
    %v373 = vunpack.c.l.b16 %v123
    %v374 = vunpack.c.h.b16 %v123
    %v375 = vunpack.c.l.b16 %v124
    %v376 = vunpack.c.h.b16 %v124
    %v377 = vunpack.c.l.b16 %v125
    %v378 = vunpack.c.h.b16 %v125
    %v379 = vunpack.c.l.b16 %v126
    %v380 = vunpack.c.h.b16 %v126
    %v381 = vunpack.c.l.b16 %v127
    %v382 = vunpack.c.h.b16 %v127
    %v383 = vunpack.c.l.b16 %v128
    %v384 = vunpack.c.h.b16 %v128
    %v385 = vunpack.c.l.b16 %v129
    %v386 = vunpack.c.h.b16 %v129
    %v387 = vunpack.c.l.b16 %v130
    %v388 = vunpack.c.h.b16 %v130
    %v389 = vunpack.c.l.b16 %v131
    %v390 = vunpack.c.h.b16 %v131
    %v391 = vunpack.c.l.b16 %v132
    %v392 = vunpack.c.h.b16 %v132
    %v393 = vunpack.c.l.b16 %v133
    %v394 = vunpack.c.h.b16 %v133
    %v395 = vunpack.c.l.b16 %v134
    %v396 = vunpack.c.h.b16 %v134
    %v397 = vunpack.c.l.b16 %v135
    %v398 = vunpack.c.h.b16 %v135
    %v399 = vunpack.c.l.b16 %v136
    %v400 = vunpack.c.h.b16 %v136
    %v401 = vunpack.c.l.b16 %v137
    %v402 = vunpack.c.h.b16 %v137
    %v403 = vunpack.c.l.b16 %v138
    %v404 = vunpack.c.h.b16 %v138
    %v405 = vunpack.c.l.b16 %v139
    %v406 = vunpack.c.h.b16 %v139
    %v407 = vunpack.c.l.b16 %v140
    %v408 = vunpack.c.h.b16 %v140
    %v409 = vunpack.c.l.b16 %v141
    %v410 = vunpack.c.h.b16 %v141
    %v411 = vunpack.c.l.b16 %v142
    %v412 = vunpack.c.h.b16 %v142
    %v413 = vunpack.c.l.b16 %v143
    %v414 = vunpack.c.h.b16 %v143
    %v415 = vunpack.c.l.b16 %v144
    %v416 = vunpack.c.h.b16 %v144
    %v417 = vunpack.c.l.b16 %v145
    %v418 = vunpack.c.h.b16 %v145
    %v419 = vunpack.c.l.b16 %v146
    %v420 = vunpack.c.h.b16 %v146
    %v421 = vunpack.c.l.b16 %v147
    %v422 = vunpack.c.h.b16 %v147
    %v423 = vunpack.c.l.b16 %v148
    %v424 = vunpack.c.h.b16 %v148
    %v425 = vunpack.c.l.b16 %v149
    %v426 = vunpack.c.h.b16 %v149
    %v427 = vunpack.c.l.b16 %v150
    %v428 = vunpack.c.h.b16 %v150
    %v429 = vunpack.c.l.b16 %v151
    %v430 = vunpack.c.h.b16 %v151
    %v431 = vunpack.c.l.b16 %v152
    %v432 = vunpack.c.h.b16 %v152
    %v433 = vunpack.c.l.b16 %v153
    %v434 = vunpack.c.h.b16 %v153
    %v435 = vunpack.c.l.b16 %v154
    %v436 = vunpack.c.h.b16 %v154
    %v437 = vunpack.c.l.b16 %v155
    %v438 = vunpack.c.h.b16 %v155
    %v439 = vunpack.c.l.b16 %v156
    %v440 = vunpack.c.h.b16 %v156
    %v441 = vunpack.c.l.b16 %v157
    %v442 = vunpack.c.h.b16 %v157
    %v443 = vunpack.c.l.b16 %v158
    %v444 = vunpack.c.h.b16 %v158
    %v445 = vunpack.c.l.b16 %v159
    %v446 = vunpack.c.h.b16 %v159
    %v447 = vunpack.c.l.b16 %v160
    %v448 = vunpack.c.h.b16 %v160
    %v449 = vunpack.c.l.b16 %v161
    %v450 = vunpack.c.h.b16 %v161
    %v451 = vunpack.c.l.b16 %v162
    %v452 = vunpack.c.h.b16 %v162
    %v453 = vunpack.c.l.b16 %v163
    %v454 = vunpack.c.h.b16 %v163
    %v455 = vunpack.c.l.b16 %v164
    %v456 = vunpack.c.h.b16 %v164
    %v457 = vunpack.c.l.b16 %v165
    %v458 = vunpack.c.h.b16 %v165
    %v459 = vunpack.c.l.b16 %v166
    %v460 = vunpack.c.h.b16 %v166
    %v461 = vunpack.c.l.b16 %v167
    %v462 = vunpack.c.h.b16 %v167
    %v463 = vunpack.c.l.b16 %v168
    %v464 = vunpack.c.h.b16 %v168
    %v465 = vunpack.c.l.b16 %v169
    %v466 = vunpack.c.h.b16 %v169
    %v467 = vunpack.c.l.b16 %v170
    %v468 = vunpack.c.h.b16 %v170
    %v469 = vunpack.c.l.b16 %v171
    %v470 = vunpack.c.h.b16 %v171
    %v471 = vunpack.c.l.b16 %v172
    %v472 = vunpack.c.h.b16 %v172
    %v473 = vunpack.c.l.b16 %v173
    %v474 = vunpack.c.h.b16 %v173
    %v475 = vunpack.c.l.b16 %v174
    %v476 = vunpack.c.h.b16 %v174
    %v477 = vunpack.c.l.b16 %v175
    %v478 = vunpack.c.h.b16 %v175
    %v479 = vunpack.c.l.b16 %v176
    %v480 = vunpack.c.h.b16 %v176
    %v481 = vunpack.c.l.b16 %v177
    %v482 = vunpack.c.h.b16 %v177
    %v483 = vunpack.c.l.b16 %v178
    %v484 = vunpack.c.h.b16 %v178
    %v485 = vpack.c.b16 %v291, %v289
    %v486 = vpack.c.b16 %v292, %v290
    %v487 = vpack.c.b16 %v295, %v293
    %v488 = vpack.c.b16 %v296, %v294
    %v489 = vpack.c.b16 %v299, %v297
    %v490 = vpack.c.b16 %v300, %v298
    %v491 = vpack.c.b16 %v303, %v301
    %v492 = vpack.c.b16 %v304, %v302
    %v493 = vpack.c.b16 %v307, %v305
    %v494 = vpack.c.b16 %v308, %v306
    %v495 = vpack.c.b16 %v311, %v309
    %v496 = vpack.c.b16 %v312, %v310
    %v497 = vpack.c.b16 %v315, %v313
    %v498 = vpack.c.b16 %v316, %v314
    %v499 = vpack.c.b16 %v319, %v317
    %v500 = vpack.c.b16 %v320, %v318
    %v501 = vpack.c.b16 %v323, %v321
    %v502 = vpack.c.b16 %v324, %v322
    %v503 = vpack.c.b16 %v327, %v325
    %v504 = vpack.c.b16 %v328, %v326
    %v505 = vpack.c.b16 %v331, %v329
    %v506 = vpack.c.b16 %v332, %v330
    %v507 = vpack.c.b16 %v335, %v333
    %v508 = vpack.c.b16 %v336, %v334
    %v509 = vpack.c.b16 %v339, %v337
    %v510 = vpack.c.b16 %v340, %v338
    %v511 = vpack.c.b16 %v343, %v341
    %v512 = vpack.c.b16 %v344, %v342
    %v513 = vpack.c.b16 %v347, %v345
    %v514 = vpack.c.b16 %v348, %v346
    %v515 = vpack.c.b16 %v351, %v349
    %v516 = vpack.c.b16 %v352, %v350
    %v517 = vpack.c.b16 %v355, %v353
    %v518 = vpack.c.b16 %v356, %v354
    %v519 = vpack.c.b16 %v359, %v357
    %v520 = vpack.c.b16 %v360, %v358
    %v521 = vpack.c.b16 %v363, %v361
    %v522 = vpack.c.b16 %v364, %v362
    %v523 = vpack.c.b16 %v367, %v365
    %v524 = vpack.c.b16 %v368, %v366
    %v525 = vpack.c.b16 %v371, %v369
    %v526 = vpack.c.b16 %v372, %v370
    %v527 = vpack.c.b16 %v375, %v373
    %v528 = vpack.c.b16 %v376, %v374
    %v529 = vpack.c.b16 %v379, %v377
    %v530 = vpack.c.b16 %v380, %v378
    %v531 = vpack.c.b16 %v383, %v381
    %v532 = vpack.c.b16 %v384, %v382
    %v533 = vpack.c.b16 %v387, %v385
    %v534 = vpack.c.b16 %v388, %v386
    %v535 = vpack.c.b16 %v391, %v389
    %v536 = vpack.c.b16 %v392, %v390
    %v537 = vpack.c.b16 %v395, %v393
    %v538 = vpack.c.b16 %v396, %v394
    %v539 = vpack.c.b16 %v399, %v397
    %v540 = vpack.c.b16 %v400, %v398
    %v541 = vpack.c.b16 %v403, %v401
    %v542 = vpack.c.b16 %v404, %v402
    %v543 = vpack.c.b16 %v407, %v405
    %v544 = vpack.c.b16 %v408, %v406
    %v545 = vpack.c.b16 %v411, %v409
    %v546 = vpack.c.b16 %v412, %v410
    %v547 = vpack.c.b16 %v415, %v413
    %v548 = vpack.c.b16 %v416, %v414
    %v549 = vpack.c.b16 %v419, %v417
    %v550 = vpack.c.b16 %v420, %v418
    %v551 = vpack.c.b16 %v423, %v421
    %v552 = vpack.c.b16 %v424, %v422
    %v553 = vpack.c.b16 %v427, %v425
    %v554 = vpack.c.b16 %v428, %v426
    %v555 = vpack.c.b16 %v431, %v429
    %v556 = vpack.c.b16 %v432, %v430
    %v557 = vpack.c.b16 %v435, %v433
    %v558 = vpack.c.b16 %v436, %v434
    %v559 = vpack.c.b16 %v439, %v437
    %v560 = vpack.c.b16 %v440, %v438
    %v561 = vpack.c.b16 %v443, %v441
    %v562 = vpack.c.b16 %v444, %v442
    %v563 = vpack.c.b16 %v447, %v445
    %v564 = vpack.c.b16 %v448, %v446
    %v565 = vpack.c.b16 %v451, %v449
    %v566 = vpack.c.b16 %v452, %v450
    %v567 = vpack.c.b16 %v455, %v453
    %v568 = vpack.c.b16 %v456, %v454
    %v569 = vpack.c.b16 %v459, %v457
    %v570 = vpack.c.b16 %v460, %v458
    %v571 = vpack.c.b16 %v463, %v461
    %v572 = vpack.c.b16 %v464, %v462
    %v573 = vpack.c.b16 %v467, %v465
    %v574 = vpack.c.b16 %v468, %v466
    %v575 = vpack.c.b16 %v471, %v469
    %v576 = vpack.c.b16 %v472, %v470
    %v577 = vpack.c.b16 %v475, %v473
    %v578 = vpack.c.b16 %v476, %v474
    %v579 = vpack.c.b16 %v479, %v477
    %v580 = vpack.c.b16 %v480, %v478
    %v581 = vpack.c.b16 %v483, %v481
    %v582 = vpack.c.b16 %v484, %v482
    %vm681 = vcmask 130048
    %v683 = vsel %vm681, %v80, 0
    %685 = vmatprep.subr.bf16.mxu0 %v500
    %686 = vmatpush1.bf16.msra.mxu0 %v499
    %687 = vmatprep.subr.bf16.mxu0 %v498
    %688 = vmatpush1.bf16.msra.mxu0 %v497
    %689 = vmatprep.subr.bf16.mxu0 %v496
    %690 = vmatpush1.bf16.msra.mxu0 %v495
    %691 = vmatprep.subr.bf16.mxu0 %v494
    %692 = vmatpush1.bf16.msra.mxu0 %v493
    %693 = vmatprep.subr.bf16.mxu0 %v492
    %694 = vmatpush1.bf16.msra.mxu0 %v491
    %695 = vmatprep.subr.bf16.mxu0 %v490
    %696 = vmatpush1.bf16.msra.mxu0 %v489
    %697 = vmatprep.subr.bf16.mxu0 %v488
    %698 = vmatpush1.bf16.msra.mxu0 %v487
    %699 = vmatprep.subr.bf16.mxu0 %v486
    %700 = vmatpush1.bf16.msra.mxu0 %v485
    %701 = vmatprep.subr.bf16.mxu0 %v516
    %702 = vmatpush2.bf16.msra.mxu0 %v515
    %703 = vmatprep.subr.bf16.mxu0 %v514
    %704 = vmatpush2.bf16.msra.mxu0 %v513
    %705 = vmatprep.subr.bf16.mxu0 %v512
    %706 = vmatpush2.bf16.msra.mxu0 %v511
    %707 = vmatprep.subr.bf16.mxu0 %v510
    %708 = vmatpush2.bf16.msra.mxu0 %v509
    %709 = vmatprep.subr.bf16.mxu0 %v508
    %710 = vmatpush2.bf16.msra.mxu0 %v507
    %711 = vmatprep.subr.bf16.mxu0 %v506
    %712 = vmatpush2.bf16.msra.mxu0 %v505
    %713 = vmatprep.subr.bf16.mxu0 %v504
    %714 = vmatpush2.bf16.msra.mxu0 %v503
    %715 = vmatprep.subr.bf16.mxu0 %v502
    %716 = vmatpush2.bf16.msra.mxu0 %v501
    %717 = vmatprep.mubr.bf16.mxu0 %v75
    %718 = vmatmul.mubr.bf16.gmra.mxu0 %v74
    %v719 = vpop.f32.mrf.mxu0
    %v720 = vadd.f32 %v184, %v719
    %v721 = vpop.f32.mrf.mxu0
    %v722 = vadd.f32 %v188, %v721
    %v723 = vpop.f32.mrf.mxu0
    %v724 = vpop.f32.mrf.mxu0
    %725 = vdwg.mxu0
    %726 = vmatprep.subr.bf16.mxu0 %v532
    %727 = vmatpush1.bf16.msra.mxu0 %v531
    %728 = vmatprep.subr.bf16.mxu0 %v530
    %729 = vmatpush1.bf16.msra.mxu0 %v529
    %730 = vmatprep.subr.bf16.mxu0 %v528
    %731 = vmatpush1.bf16.msra.mxu0 %v527
    %732 = vmatprep.subr.bf16.mxu0 %v526
    %733 = vmatpush1.bf16.msra.mxu0 %v525
    %734 = vmatprep.subr.bf16.mxu0 %v524
    %735 = vmatpush1.bf16.msra.mxu0 %v523
    %736 = vmatprep.subr.bf16.mxu0 %v522
    %737 = vmatpush1.bf16.msra.mxu0 %v521
    %738 = vmatprep.subr.bf16.mxu0 %v520
    %739 = vmatpush1.bf16.msra.mxu0 %v519
    %740 = vmatprep.subr.bf16.mxu0 %v518
    %741 = vmatpush1.bf16.msra.mxu0 %v517
    %742 = vmatprep.subr.bf16.mxu0 %v548
    %743 = vmatpush2.bf16.msra.mxu0 %v547
    %744 = vmatprep.subr.bf16.mxu0 %v546
    %745 = vmatpush2.bf16.msra.mxu0 %v545
    %746 = vmatprep.subr.bf16.mxu0 %v544
    %747 = vmatpush2.bf16.msra.mxu0 %v543
    %748 = vmatprep.subr.bf16.mxu0 %v542
    %749 = vmatpush2.bf16.msra.mxu0 %v541
    %750 = vmatprep.subr.bf16.mxu0 %v540
    %751 = vmatpush2.bf16.msra.mxu0 %v539
    %752 = vmatprep.subr.bf16.mxu0 %v538
    %753 = vmatpush2.bf16.msra.mxu0 %v537
    %754 = vmatprep.subr.bf16.mxu0 %v536
    %755 = vmatpush2.bf16.msra.mxu0 %v535
    %756 = vmatprep.subr.bf16.mxu0 %v534
    %757 = vmatpush2.bf16.msra.mxu0 %v533
    %758 = vmatprep.mubr.bf16.mxu0 %v77
    %759 = vmatmul.mubr.bf16.gmra.mxu0 %v76
    %v760 = vpop.f32.mrf.mxu0
    %v761 = vadd.f32 %v720, %v760
    %v762 = vpop.f32.mrf.mxu0
    %v763 = vadd.f32 %v722, %v762
    %v764 = vpop.f32.mrf.mxu0
    %v765 = vpop.f32.mrf.mxu0
    %766 = vdwg.mxu0
    %767 = vmatprep.subr.bf16.mxu0 %v564
    %768 = vmatpush1.bf16.msra.mxu0 %v563
    %769 = vmatprep.subr.bf16.mxu0 %v562
    %770 = vmatpush1.bf16.msra.mxu0 %v561
    %771 = vmatprep.subr.bf16.mxu0 %v560
    %772 = vmatpush1.bf16.msra.mxu0 %v559
    %773 = vmatprep.subr.bf16.mxu0 %v558
    %774 = vmatpush1.bf16.msra.mxu0 %v557
    %775 = vmatprep.subr.bf16.mxu0 %v556
    %776 = vmatpush1.bf16.msra.mxu0 %v555
    %777 = vmatprep.subr.bf16.mxu0 %v554
    %778 = vmatpush1.bf16.msra.mxu0 %v553
    %779 = vmatprep.subr.bf16.mxu0 %v552
    %780 = vmatpush1.bf16.msra.mxu0 %v551
    %781 = vmatprep.subr.bf16.mxu0 %v550
    %782 = vmatpush1.bf16.msra.mxu0 %v549
    %783 = vmatprep.subr.bf16.mxu0 %v580
    %784 = vmatpush2.bf16.msra.mxu0 %v579
    %785 = vmatprep.subr.bf16.mxu0 %v578
    %786 = vmatpush2.bf16.msra.mxu0 %v577
    %787 = vmatprep.subr.bf16.mxu0 %v576
    %788 = vmatpush2.bf16.msra.mxu0 %v575
    %789 = vmatprep.subr.bf16.mxu0 %v574
    %790 = vmatpush2.bf16.msra.mxu0 %v573
    %791 = vmatprep.subr.bf16.mxu0 %v572
    %792 = vmatpush2.bf16.msra.mxu0 %v571
    %793 = vmatprep.subr.bf16.mxu0 %v570
    %794 = vmatpush2.bf16.msra.mxu0 %v569
    %795 = vmatprep.subr.bf16.mxu0 %v568
    %796 = vmatpush2.bf16.msra.mxu0 %v567
    %797 = vmatprep.subr.bf16.mxu0 %v566
    %798 = vmatpush2.bf16.msra.mxu0 %v565
    %799 = vmatprep.mubr.bf16.mxu0 %v79
    %800 = vmatmul.mubr.bf16.gmra.mxu0 %v78
    %v801 = vpop.f32.mrf.mxu0
    %v802 = vadd.f32 %v761, %v801
    %v803 = vpop.f32.mrf.mxu0
    %v804 = vadd.f32 %v763, %v803
    %v805 = vpop.f32.mrf.mxu0
    %v806 = vpop.f32.mrf.mxu0
    %807 = vdwg.mxu0
    %808 = vmatprep.subr.bf16.mxu0 0
    %809 = vmatpush1.bf16.msra.mxu0 0
    %810 = vmatprep.subr.bf16.mxu0 0
    %811 = vmatpush1.bf16.msra.mxu0 0
    %812 = vmatprep.subr.bf16.mxu0 0
    %813 = vmatpush1.bf16.msra.mxu0 0
    %814 = vmatprep.subr.bf16.mxu0 0
    %815 = vmatpush1.bf16.msra.mxu0 0
    %816 = vmatprep.subr.bf16.mxu0 0
    %817 = vmatpush1.bf16.msra.mxu0 0
    %818 = vmatprep.subr.bf16.mxu0 0
    %819 = vmatpush1.bf16.msra.mxu0 0
    %820 = vmatprep.subr.bf16.mxu0 0
    %821 = vmatpush1.bf16.msra.mxu0 0
    %822 = vmatprep.subr.bf16.mxu0 %v582
    %823 = vmatpush1.bf16.msra.mxu0 %v581
    %824 = vmatprep.subr.bf16.mxu0 0
    %825 = vmatpush2.bf16.msra.mxu0 0
    %826 = vmatprep.subr.bf16.mxu0 0
    %827 = vmatpush2.bf16.msra.mxu0 0
    %828 = vmatprep.subr.bf16.mxu0 0
    %829 = vmatpush2.bf16.msra.mxu0 0
    %830 = vmatprep.subr.bf16.mxu0 0
    %831 = vmatpush2.bf16.msra.mxu0 0
    %832 = vmatprep.subr.bf16.mxu0 0
    %833 = vmatpush2.bf16.msra.mxu0 0
    %834 = vmatprep.subr.bf16.mxu0 0
    %835 = vmatpush2.bf16.msra.mxu0 0
    %836 = vmatprep.subr.bf16.mxu0 0
    %837 = vmatpush2.bf16.msra.mxu0 0
    %838 = vmatprep.subr.bf16.mxu0 0
    %839 = vmatpush2.bf16.msra.mxu0 0
    %840 = vmatprep.mubr.bf16.mxu0 0
    %841 = vmatmul.mubr.bf16.gmra.mxu0 %v683
    %v842 = vpop.f32.mrf.mxu0
    %v843 = vadd.f32 %v802, %v842
    %v844 = vpop.f32.mrf.mxu0
    %v845 = vadd.f32 %v804, %v844
    %v846 = vpop.f32.mrf.mxu0
    %v847 = vpop.f32.mrf.mxu0
    %848 = vdwg.mxu0
    %vm849 = vcmp.gt.f32.partialorder %v843, 0.0
    %vm850 = vcmp.gt.f32.partialorder %v845, 0.0
    %v851 = vmul.f32 %v843, 0.2
    %v852 = vmul.f32 %v845, 0.2
    %v853 = vsel %vm849, %v843, %v851
    %v854 = vsel %vm850, %v845, %v852
    %v855 = vpack.c.bf16 %v853, %v853
    %v856 = vpack.c.bf16 %v854, %v854
    %v857 = vld [vmem:[#allocation7] sm:$0xff]
    %v858 = vld [vmem:[#allocation7 + $0x8] sm:$0xff]
    %v859 = vld [vmem:[#allocation7 + $0x10] sm:$0xff]
    %v860 = vld [vmem:[#allocation7 + $0x18] sm:$0xff]
    %v861 = vld [vmem:[#allocation7 + $0x20] sm:$0xff]
    %v862 = vld [vmem:[#allocation7 + $0x28] sm:$0xff]
    %v863 = vld [vmem:[#allocation7 + $0x30] sm:$0xff]
    %v864 = vld [vmem:[#allocation7 + $0x38] sm:$0xff]
    %v865 = vld [vmem:[#allocation7 + $0x40] sm:$0xff]
    %v866 = vld [vmem:[#allocation7 + $0x48] sm:$0xff]
    %v867 = vld [vmem:[#allocation7 + $0x50] sm:$0xff]
    %v868 = vld [vmem:[#allocation7 + $0x58] sm:$0xff]
    %v869 = vld [vmem:[#allocation7 + $0x60] sm:$0xff]
    %v870 = vld [vmem:[#allocation7 + $0x68] sm:$0xff]
    %v871 = vld [vmem:[#allocation7 + $0x70] sm:$0xff]
    %v872 = vld [vmem:[#allocation7 + $0x78] sm:$0xff]
    %v873 = vld [vmem:[#allocation7 + $0x80] sm:$0xff]
    %v874 = vld [vmem:[#allocation7 + $0x88] sm:$0xff]
    %v875 = vld [vmem:[#allocation7 + $0x90] sm:$0xff]
    %v876 = vld [vmem:[#allocation7 + $0x98] sm:$0xff]
    %v877 = vld [vmem:[#allocation7 + $0xa0] sm:$0xff]
    %v878 = vld [vmem:[#allocation7 + $0xa8] sm:$0xff]
    %v879 = vld [vmem:[#allocation7 + $0xb0] sm:$0xff]
    %v880 = vld [vmem:[#allocation7 + $0xb8] sm:$0xff]
    %v881 = vld [vmem:[#allocation7 + $0xc0] sm:$0xff]
    %v882 = vld [vmem:[#allocation7 + $0xc8] sm:$0xff]
    %v883 = vld [vmem:[#allocation7 + $0xd0] sm:$0xff]
    %v884 = vld [vmem:[#allocation7 + $0xd8] sm:$0xff]
    %v885 = vld [vmem:[#allocation7 + $0xe0] sm:$0xff]
    %v886 = vld [vmem:[#allocation7 + $0xe8] sm:$0xff]
    %v887 = vld [vmem:[#allocation7 + $0xf0] sm:$0xff]
    %v888 = vld [vmem:[#allocation7 + $0xf8] sm:$0xff]
    %v889 = vld [vmem:[%s4] sm:$0x3]
    %v891 = vlaneseq
    %v892 = vshrl.u32 %v891, 7
    %v893 = vsub.s32 0, %v892
    %v894 = vrot.slane %v889, %v893
    %v895 = vlaneseq
    %v896 = vshrl.u32 %v895, 7
    %v897 = vsub.s32 1, %v896
    %v898 = vrot.slane %v889, %v897
    %v933 = vunpack.c.l.b16 %v857
    %v934 = vunpack.c.h.b16 %v857
    %v935 = vunpack.c.l.b16 %v858
    %v936 = vunpack.c.h.b16 %v858
    %v937 = vunpack.c.l.b16 %v859
    %v938 = vunpack.c.h.b16 %v859
    %v939 = vunpack.c.l.b16 %v860
    %v940 = vunpack.c.h.b16 %v860
    %v941 = vunpack.c.l.b16 %v861
    %v942 = vunpack.c.h.b16 %v861
    %v943 = vunpack.c.l.b16 %v862
    %v944 = vunpack.c.h.b16 %v862
    %v945 = vunpack.c.l.b16 %v863
    %v946 = vunpack.c.h.b16 %v863
    %v947 = vunpack.c.l.b16 %v864
    %v948 = vunpack.c.h.b16 %v864
    %v949 = vunpack.c.l.b16 %v865
    %v950 = vunpack.c.h.b16 %v865
    %v951 = vunpack.c.l.b16 %v866
    %v952 = vunpack.c.h.b16 %v866
    %v953 = vunpack.c.l.b16 %v867
    %v954 = vunpack.c.h.b16 %v867
    %v955 = vunpack.c.l.b16 %v868
    %v956 = vunpack.c.h.b16 %v868
    %v957 = vunpack.c.l.b16 %v869
    %v958 = vunpack.c.h.b16 %v869
    %v959 = vunpack.c.l.b16 %v870
    %v960 = vunpack.c.h.b16 %v870
    %v961 = vunpack.c.l.b16 %v871
    %v962 = vunpack.c.h.b16 %v871
    %v963 = vunpack.c.l.b16 %v872
    %v964 = vunpack.c.h.b16 %v872
    %v965 = vunpack.c.l.b16 %v873
    %v966 = vunpack.c.h.b16 %v873
    %v967 = vunpack.c.l.b16 %v874
    %v968 = vunpack.c.h.b16 %v874
    %v969 = vunpack.c.l.b16 %v875
    %v970 = vunpack.c.h.b16 %v875
    %v971 = vunpack.c.l.b16 %v876
    %v972 = vunpack.c.h.b16 %v876
    %v973 = vunpack.c.l.b16 %v877
    %v974 = vunpack.c.h.b16 %v877
    %v975 = vunpack.c.l.b16 %v878
    %v976 = vunpack.c.h.b16 %v878
    %v977 = vunpack.c.l.b16 %v879
    %v978 = vunpack.c.h.b16 %v879
    %v979 = vunpack.c.l.b16 %v880
    %v980 = vunpack.c.h.b16 %v880
    %v981 = vunpack.c.l.b16 %v881
    %v982 = vunpack.c.h.b16 %v881
    %v983 = vunpack.c.l.b16 %v882
    %v984 = vunpack.c.h.b16 %v882
    %v985 = vunpack.c.l.b16 %v883
    %v986 = vunpack.c.h.b16 %v883
    %v987 = vunpack.c.l.b16 %v884
    %v988 = vunpack.c.h.b16 %v884
    %v989 = vunpack.c.l.b16 %v885
    %v990 = vunpack.c.h.b16 %v885
    %v991 = vunpack.c.l.b16 %v886
    %v992 = vunpack.c.h.b16 %v886
    %v993 = vunpack.c.l.b16 %v887
    %v994 = vunpack.c.h.b16 %v887
    %v995 = vunpack.c.l.b16 %v888
    %v996 = vunpack.c.h.b16 %v888
    %v997 = vpack.c.b16 %v935, %v933
    %v998 = vpack.c.b16 %v936, %v934
    %v999 = vpack.c.b16 %v939, %v937
    %v1000 = vpack.c.b16 %v940, %v938
    %v1001 = vpack.c.b16 %v943, %v941
    %v1002 = vpack.c.b16 %v944, %v942
    %v1003 = vpack.c.b16 %v947, %v945
    %v1004 = vpack.c.b16 %v948, %v946
    %v1005 = vpack.c.b16 %v951, %v949
    %v1006 = vpack.c.b16 %v952, %v950
    %v1007 = vpack.c.b16 %v955, %v953
    %v1008 = vpack.c.b16 %v956, %v954
    %v1009 = vpack.c.b16 %v959, %v957
    %v1010 = vpack.c.b16 %v960, %v958
    %v1011 = vpack.c.b16 %v963, %v961
    %v1012 = vpack.c.b16 %v964, %v962
    %v1013 = vpack.c.b16 %v967, %v965
    %v1014 = vpack.c.b16 %v968, %v966
    %v1015 = vpack.c.b16 %v971, %v969
    %v1016 = vpack.c.b16 %v972, %v970
    %v1017 = vpack.c.b16 %v975, %v973
    %v1018 = vpack.c.b16 %v976, %v974
    %v1019 = vpack.c.b16 %v979, %v977
    %v1020 = vpack.c.b16 %v980, %v978
    %v1021 = vpack.c.b16 %v983, %v981
    %v1022 = vpack.c.b16 %v984, %v982
    %v1023 = vpack.c.b16 %v987, %v985
    %v1024 = vpack.c.b16 %v988, %v986
    %v1025 = vpack.c.b16 %v991, %v989
    %v1026 = vpack.c.b16 %v992, %v990
    %v1027 = vpack.c.b16 %v995, %v993
    %v1028 = vpack.c.b16 %v996, %v994
    %1061 = vmatprep.subr.bf16.mxu0 %v1012
    %1062 = vmatpush1.bf16.msra.mxu0 %v1011
    %1063 = vmatprep.subr.bf16.mxu0 %v1010
    %1064 = vmatpush1.bf16.msra.mxu0 %v1009
    %1065 = vmatprep.subr.bf16.mxu0 %v1008
    %1066 = vmatpush1.bf16.msra.mxu0 %v1007
    %1067 = vmatprep.subr.bf16.mxu0 %v1006
    %1068 = vmatpush1.bf16.msra.mxu0 %v1005
    %1069 = vmatprep.subr.bf16.mxu0 %v1004
    %1070 = vmatpush1.bf16.msra.mxu0 %v1003
    %1071 = vmatprep.subr.bf16.mxu0 %v1002
    %1072 = vmatpush1.bf16.msra.mxu0 %v1001
    %1073 = vmatprep.subr.bf16.mxu0 %v1000
    %1074 = vmatpush1.bf16.msra.mxu0 %v999
    %1075 = vmatprep.subr.bf16.mxu0 %v998
    %1076 = vmatpush1.bf16.msra.mxu0 %v997
    %1077 = vmatprep.subr.bf16.mxu0 %v1028
    %1078 = vmatpush2.bf16.msra.mxu0 %v1027
    %1079 = vmatprep.subr.bf16.mxu0 %v1026
    %1080 = vmatpush2.bf16.msra.mxu0 %v1025
    %1081 = vmatprep.subr.bf16.mxu0 %v1024
    %1082 = vmatpush2.bf16.msra.mxu0 %v1023
    %1083 = vmatprep.subr.bf16.mxu0 %v1022
    %1084 = vmatpush2.bf16.msra.mxu0 %v1021
    %1085 = vmatprep.subr.bf16.mxu0 %v1020
    %1086 = vmatpush2.bf16.msra.mxu0 %v1019
    %1087 = vmatprep.subr.bf16.mxu0 %v1018
    %1088 = vmatpush2.bf16.msra.mxu0 %v1017
    %1089 = vmatprep.subr.bf16.mxu0 %v1016
    %1090 = vmatpush2.bf16.msra.mxu0 %v1015
    %1091 = vmatprep.subr.bf16.mxu0 %v1014
    %1092 = vmatpush2.bf16.msra.mxu0 %v1013
    %1093 = vmatprep.mubr.bf16.mxu0 %v856
    %1094 = vmatmul.mubr.bf16.gmra.mxu0 %v855
    %v1095 = vpop.f32.mrf.mxu0
    %v1096 = vadd.f32 %v894, %v1095
    %v1097 = vpop.f32.mrf.mxu0
    %v1098 = vadd.f32 %v898, %v1097
    %v1099 = vpop.f32.mrf.mxu0
    %v1100 = vpop.f32.mrf.mxu0
    %1101 = vdwg.mxu0
    %vm1102 = vcmp.gt.f32.partialorder %v1096, 0.0
    %vm1103 = vcmp.gt.f32.partialorder %v1098, 0.0
    %v1104 = vmul.f32 %v1096, 0.2
    %v1105 = vmul.f32 %v1098, 0.2
    %v1106 = vsel %vm1102, %v1096, %v1104
    %v1107 = vsel %vm1103, %v1098, %v1105
    %v1108 = vld [vmem:[%s5] sm:$0x3]
    %v1110 = vlaneseq
    %v1111 = vshrl.u32 %v1110, 7
    %v1112 = vsub.s32 0, %v1111
    %v1113 = vrot.slane %v1108, %v1112
    %v1114 = vlaneseq
    %v1115 = vshrl.u32 %v1114, 7
    %v1116 = vsub.s32 1, %v1115
    %v1117 = vrot.slane %v1108, %v1116
    %v1120 = vmul.f32 %v1106, %v1113
    %v1121 = vmul.f32 %v1107, %v1117
    %v1122 = vadd.f32 %v1120, %v1121
    %1123 = vadd.xlane.f32.xlu0 %v1122
    %v1124 = vpop.xlane.xlu0 %1123
    %s1125 = sld [smem:[#allocation2]]
    %v1126 = vstv %s1125
    %v1127 = vadd.f32 %v1124, %v1126
    %v1128 = vxor.u32 %v1127, 2147483648
    %v1129 = vmul.f32 %v1128, 1.442695
    %v1130 = vpow.pop %v1129
    %v1131 = vadd.f32 %v1130, 1.0
    %v1132 = vrcp.pop %v1131
    %v1133 = vmul.f32 1.0, %v1132
    %vm1134 = vcmask 7168
    %1135 = vst.msk [vmem:[%s7] sm:$0xff] %vm1134, %v1133
    // Predicated region
    $region42: #{tpu_custom_call.1} parent=1 // pred_check
      _
    $region43: #{tpu_custom_call.1} parent=1 // pred_check_branch
      %1137 = sbr.rel (0) target = $region45
    $region44: #{tpu_custom_call.1} parent=1 // pred_region
      _
    $region45: #{tpu_custom_call.1} parent=1 // pred_fallthru
      _
    // Predicated region
    $region46: #{tpu_custom_call.1} parent=1 // pred_check
      _
    $region47: #{tpu_custom_call.1} parent=1 // pred_check_branch
      %1139 = sbr.rel (0) target = $region49
    $region48: #{tpu_custom_call.1} parent=1 // pred_region
      _
    $region49: #{tpu_custom_call.1} parent=1 // pred_fallthru
      _
    %1140 = vsyncpa [#allocation4], 1
    %1141 = vsyncpa [#allocation6], 1

</llo_original>
